<compile_context>
chip_gen: v5e
topology: v5e:2x2
jax: 0.10.0
libtpu: 0.0.40
codegen_flags: <defaults>
</compile_context>

<pallas_src>
import jax
import jax.numpy as jnp
from jax import lax
from jax.experimental import pallas as pl
from jax.experimental.pallas import tpu as pltpu


def _gru_gates(x, h, wih, whh, bih, bhh):
    """One GRU cell step, PyTorch gate order (r, z, n). Weights are per-gate."""
    gi_r = jnp.dot(x, wih[0], preferred_element_type=jnp.float32) + bih[0]
    gi_z = jnp.dot(x, wih[1], preferred_element_type=jnp.float32) + bih[1]
    gi_n = jnp.dot(x, wih[2], preferred_element_type=jnp.float32) + bih[2]
    gh_r = jnp.dot(h, whh[0], preferred_element_type=jnp.float32) + bhh[0]
    gh_z = jnp.dot(h, whh[1], preferred_element_type=jnp.float32) + bhh[1]
    gh_n = jnp.dot(h, whh[2], preferred_element_type=jnp.float32) + bhh[2]
    r = jax.nn.sigmoid(gi_r + gh_r)
    z = jax.nn.sigmoid(gi_z + gh_z)
    n = jnp.tanh(gi_n + r * gh_n)
    return (1.0 - z) * n + z * h


def _encoder_kernel(ids_ref, len_ref, embed_ref,
                    wih_f_ref, whh_f_ref, bih_f_ref, bhh_f_ref,
                    wih_b_ref, whh_b_ref, bih_b_ref, bhh_b_ref,
                    wfc_ref, bfc_ref,
                    out_f_ref, out_b_ref, hid_ref,
                    emb_sc):
    T, TB, _ = ids_ref.shape
    V, E = embed_ref.shape
    H = whh_f_ref.shape[-1]

    lengths = len_ref[...]                       # (TB, 1) int32
    embed_tab = embed_ref[...]                   # (V, E), resident in VMEM

    # Hoist per-gate weight loads out of the time loops.
    wih_f = (wih_f_ref[0], wih_f_ref[1], wih_f_ref[2])
    whh_f = (whh_f_ref[0], whh_f_ref[1], whh_f_ref[2])
    bih_f = (bih_f_ref[0], bih_f_ref[1], bih_f_ref[2])
    bhh_f = (bhh_f_ref[0], bhh_f_ref[1], bhh_f_ref[2])
    wih_b = (wih_b_ref[0], wih_b_ref[1], wih_b_ref[2])
    whh_b = (whh_b_ref[0], whh_b_ref[1], whh_b_ref[2])
    bih_b = (bih_b_ref[0], bih_b_ref[1], bih_b_ref[2])
    bhh_b = (bhh_b_ref[0], bhh_b_ref[1], bhh_b_ref[2])

    h0 = jnp.zeros((TB, H), jnp.float32)

    # ---- forward direction (also materializes the embedded sequence once) ----
    def fwd_body(t, h):
        ids_t = ids_ref[t]                                        # (TB, 1) int32
        onehot = lax.broadcasted_iota(jnp.int32, (TB, V), 1) == ids_t
        # Embedding lookup as a one-hot matmul on the MXU.
        # Dropout is eval-mode identity.
        # TODO(synk): training-mode dropout would use pltpu.prng_* on x_t.
        x_t = jnp.dot(onehot.astype(jnp.float32), embed_tab,
                      preferred_element_type=jnp.float32)          # (TB, E)
        emb_sc[t] = x_t                                            # cache for bwd
        cand = _gru_gates(x_t, h, wih_f, whh_f, bih_f, bhh_f)
        valid = t < lengths                                        # (TB, 1) bool
        h_new = jnp.where(valid, cand, h)                          # hold on pad
        out_f_ref[t] = jnp.where(valid, h_new, 0.0)                # packed zeros
        return h_new

    h_fwd = lax.fori_loop(0, T, fwd_body, h0)   # final fwd state == h[len-1]

    # ---- backward direction (processes t = T-1 .. 0) ----
    def bwd_body(i, h):
        t = T - 1 - i
        x_t = emb_sc[t]
        cand = _gru_gates(x_t, h, wih_b, whh_b, bih_b, bhh_b)
        valid = t < lengths
        h_new = jnp.where(valid, cand, 0.0)     # state is 0 until t == len-1
        out_b_ref[t] = h_new
        return h_new

    h_bwd = lax.fori_loop(0, T, bwd_body, h0)   # final bwd state == h at t = 0

    # ---- hid = tanh(fc(cat(h_fwd, h_bwd))) without an explicit concat ----
    hid = jnp.tanh(
        jnp.dot(h_fwd, wfc_ref[0], preferred_element_type=jnp.float32)
        + jnp.dot(h_bwd, wfc_ref[1], preferred_element_type=jnp.float32)
        + bfc_ref[...])
    hid_ref[...] = hid.astype(hid_ref.dtype)


def encoder_forward(ids, lengths, params, *, batch_tile=8, interpret=False):
    """ids: (B, T) int tokens; lengths: (B,) int valid lengths.

    Returns (out, hid):
      out: (B, T, 2*H) GRU outputs, zeros at padded positions.
      hid: (1, B, Dd)  tanh(fc(cat(final fwd hidden, final bwd hidden))).
    """
    ids = ids.astype(jnp.int32)
    lengths = lengths.astype(jnp.int32)
    B, T = ids.shape
    V, E = params["embed"].shape
    H = params["whh_f"].shape[-1]
    Dd = params["wfc"].shape[-1]
    f32 = jnp.float32

    TB = int(batch_tile)
    B_pad = ((B + TB - 1) // TB) * TB          # no divisibility assert: pad rows
    n_tiles = B_pad // TB

    # Time-major layouts for clean per-timestep first-axis indexing.
    ids_tb = jnp.transpose(ids, (1, 0))                              # (T, B)
    ids_tb = jnp.pad(ids_tb, ((0, 0), (0, B_pad - B)))[..., None]    # (T, Bp, 1)
    len_p = jnp.pad(lengths, (0, B_pad - B)).reshape(B_pad, 1)       # (Bp, 1)

    weight_names = ("embed", "wih_f", "whh_f", "bih_f", "bhh_f",
                    "wih_b", "whh_b", "bih_b", "bhh_b", "wfc", "bfc")
    weight_args = [params[k].astype(f32) for k in weight_names]

    def full_spec(shape):
        nd = len(shape)
        return pl.BlockSpec(shape, lambda i, _nd=nd: (0,) * _nd)

    in_specs = [
        pl.BlockSpec((T, TB, 1), lambda i: (0, i, 0)),   # token ids
        pl.BlockSpec((TB, 1), lambda i: (i, 0)),         # lengths
    ] + [full_spec(w.shape) for w in weight_args]        # resident weights

    out_shape = (
        jax.ShapeDtypeStruct((T, B_pad, H), f32),        # forward outputs
        jax.ShapeDtypeStruct((T, B_pad, H), f32),        # backward outputs
        jax.ShapeDtypeStruct((B_pad, Dd), f32),          # tanh(fc(cat(hf, hb)))
    )
    out_specs = [
        pl.BlockSpec((T, TB, H), lambda i: (0, i, 0)),
        pl.BlockSpec((T, TB, H), lambda i: (0, i, 0)),
        pl.BlockSpec((TB, Dd), lambda i: (i, 0)),
    ]

    # VMEM budget: resident weights + double-buffered per-tile blocks + scratch.
    bpe = 4
    tile_bytes = (T * TB * 1 * 4 + TB * 4            # ids, lengths
                  + 2 * T * TB * H * bpe             # out_f, out_b
                  + TB * Dd * bpe                    # hid
                  + T * TB * E * bpe)                # embedded-seq scratch
    weight_bytes = sum(int(w.size) * bpe for w in weight_args)
    vmem_needed = 2 * tile_bytes + weight_bytes
    vmem_limit = None
    if vmem_needed > 12 * 1024 * 1024:               # exceeds smallest default
        vmem_limit = min(int(1.5 * vmem_needed), 48 * 1024 * 1024)

    out_f, out_b, hid = pl.pallas_call(
        _encoder_kernel,
        out_shape=out_shape,
        grid_spec=pltpu.PrefetchScalarGridSpec(
            num_scalar_prefetch=0,
            grid=(n_tiles,),
            in_specs=in_specs,
            out_specs=out_specs,
            scratch_shapes=[pltpu.VMEM((T, TB, E), f32)],
        ),
        compiler_params=pltpu.CompilerParams(
            dimension_semantics=("parallel",),       # batch tiles independent
            vmem_limit_bytes=vmem_limit,
        ),
        interpret=interpret,
    )(ids_tb, len_p, *weight_args)

    out = jnp.concatenate([out_f[:, :B], out_b[:, :B]], axis=-1)   # (T, B, 2H)
    out = jnp.transpose(out, (1, 0, 2))                            # (B, T, 2H)
    hid = hid[:B][None]                                            # (1, B, Dd)
    return out, hid


def encoder_ref(ids, lengths, p):
    """Pure-JAX reference with packed-sequence (length-masked) GRU semantics."""
    emb = p["embed"][ids]                            # (B, T, E); eval dropout
    B, T, _ = emb.shape
    H = p["whh_f"].shape[-1]
    mask = jnp.arange(T)[None, :] < lengths[:, None]

    h = jnp.zeros((B, H), jnp.float32)
    outs_f = []
    for t in range(T):
        cand = _gru_gates(emb[:, t], h, p["wih_f"], p["whh_f"],
                          p["bih_f"], p["bhh_f"])
        m = mask[:, t][:, None]
        h = jnp.where(m, cand, h)
        outs_f.append(jnp.where(m, h, 0.0))
    h_f = h

    h = jnp.zeros((B, H), jnp.float32)
    outs_b = [None] * T
    for t in range(T - 1, -1, -1):
        cand = _gru_gates(emb[:, t], h, p["wih_b"], p["whh_b"],
                          p["bih_b"], p["bhh_b"])
        m = mask[:, t][:, None]
        h = jnp.where(m, cand, 0.0)
        outs_b[t] = h
    h_b = h

    out = jnp.concatenate([jnp.stack(outs_f, axis=1),
                           jnp.stack(outs_b, axis=1)], axis=-1)
    hid = jnp.tanh(h_f @ p["wfc"][0] + h_b @ p["wfc"][1] + p["bfc"])
    return out, hid[None]


def init_params(key, vocab_size, embed_size, enc_hidden, dec_hidden):
    ks = jax.random.split(key, 11)
    s = 1.0 / float(enc_hidden) ** 0.5

    def rnd(k, shape, scale):
        return (scale * jax.random.normal(k, shape)).astype(jnp.float32)

    return dict(
        embed=rnd(ks[0], (vocab_size, embed_size), 0.5),
        wih_f=rnd(ks[1], (3, embed_size, enc_hidden), s),
        whh_f=rnd(ks[2], (3, enc_hidden, enc_hidden), s),
        bih_f=rnd(ks[3], (3, 1, enc_hidden), s),
        bhh_f=rnd(ks[4], (3, 1, enc_hidden), s),
        wih_b=rnd(ks[5], (3, embed_size, enc_hidden), s),
        whh_b=rnd(ks[6], (3, enc_hidden, enc_hidden), s),
        bih_b=rnd(ks[7], (3, 1, enc_hidden), s),
        bhh_b=rnd(ks[8], (3, 1, enc_hidden), s),
        wfc=rnd(ks[9], (2, enc_hidden, dec_hidden), s),
        bfc=rnd(ks[10], (1, dec_hidden), s),
    )


if __name__ == "__main__":
    key = jax.random.PRNGKey(0)
    k_ids, k_par = jax.random.split(key)

    B, T = 2, 8
    vocab_size, embed_size, enc_hidden, dec_hidden = 64, 32, 32, 32

    ids = jax.random.randint(k_ids, (B, T), 0, vocab_size, dtype=jnp.int32)
    lengths = jnp.array([T, 5], dtype=jnp.int32)   # max length == T
    params = init_params(k_par, vocab_size, embed_size, enc_hidden, dec_hidden)

    out, hid = encoder_forward(ids, lengths, params)
    out, hid = jax.block_until_ready((out, hid))

    out_ref, hid_ref = encoder_ref(ids, lengths, params)
    assert out.shape == (B, T, 2 * enc_hidden), out.shape
    assert hid.shape == (1, B, dec_hidden), hid.shape
    assert jnp.allclose(out, out_ref, rtol=2e-3, atol=2e-3), float(
        jnp.max(jnp.abs(out - out_ref)))
    assert jnp.allclose(hid, hid_ref, rtol=2e-3, atol=2e-3), float(
        jnp.max(jnp.abs(hid - hid_ref)))
    print("KERNEL_OK")
</pallas_src>

<mosaic_0001>
module attributes {stable_mosaic.version = 11 : i64} {
  func.func @_encoder_kernel(%arg0: i32, %arg1: memref<8x8x1xi32, #tpu.memory_space<vmem>>, %arg2: memref<8x1xi32, #tpu.memory_space<vmem>>, %arg3: memref<64x32xf32, #tpu.memory_space<vmem>>, %arg4: memref<3x32x32xf32, #tpu.memory_space<vmem>>, %arg5: memref<3x32x32xf32, #tpu.memory_space<vmem>>, %arg6: memref<3x1x32xf32, #tpu.memory_space<vmem>>, %arg7: memref<3x1x32xf32, #tpu.memory_space<vmem>>, %arg8: memref<3x32x32xf32, #tpu.memory_space<vmem>>, %arg9: memref<3x32x32xf32, #tpu.memory_space<vmem>>, %arg10: memref<3x1x32xf32, #tpu.memory_space<vmem>>, %arg11: memref<3x1x32xf32, #tpu.memory_space<vmem>>, %arg12: memref<2x32x32xf32, #tpu.memory_space<vmem>>, %arg13: memref<1x32xf32, #tpu.memory_space<vmem>>, %arg14: memref<8x8x32xf32, #tpu.memory_space<vmem>>, %arg15: memref<8x8x32xf32, #tpu.memory_space<vmem>>, %arg16: memref<8x32xf32, #tpu.memory_space<vmem>>, %arg17: memref<8x8x32xf32, #tpu.memory_space<vmem>>) attributes {dimension_semantics = [#tpu.dimension_semantics<parallel>], iteration_bounds = array<i64: 1>, scalar_prefetch = 0 : i64, scratch_operands = 1 : i64, tpu.core_type = #tpu.core_type<tc>, window_params = [{transform_indices = @transform_0, window_bounds = array<i64: 8, 8, 1>}, {transform_indices = @transform_1, window_bounds = array<i64: 8, 1>}, {pipeline_mode = #tpu.pipeline_mode<synchronous>, transform_indices = @transform_2, window_bounds = array<i64: 64, 32>}, {pipeline_mode = #tpu.pipeline_mode<synchronous>, transform_indices = @transform_3, window_bounds = array<i64: 3, 32, 32>}, {pipeline_mode = #tpu.pipeline_mode<synchronous>, transform_indices = @transform_4, window_bounds = array<i64: 3, 32, 32>}, {pipeline_mode = #tpu.pipeline_mode<synchronous>, transform_indices = @transform_5, window_bounds = array<i64: 3, 1, 32>}, {pipeline_mode = #tpu.pipeline_mode<synchronous>, transform_indices = @transform_6, window_bounds = array<i64: 3, 1, 32>}, {pipeline_mode = #tpu.pipeline_mode<synchronous>, transform_indices = @transform_7, window_bounds = array<i64: 3, 32, 32>}, {pipeline_mode = #tpu.pipeline_mode<synchronous>, transform_indices = @transform_8, window_bounds = array<i64: 3, 32, 32>}, {pipeline_mode = #tpu.pipeline_mode<synchronous>, transform_indices = @transform_9, window_bounds = array<i64: 3, 1, 32>}, {pipeline_mode = #tpu.pipeline_mode<synchronous>, transform_indices = @transform_10, window_bounds = array<i64: 3, 1, 32>}, {pipeline_mode = #tpu.pipeline_mode<synchronous>, transform_indices = @transform_11, window_bounds = array<i64: 2, 32, 32>}, {pipeline_mode = #tpu.pipeline_mode<synchronous>, transform_indices = @transform_12, window_bounds = array<i64: 1, 32>}, {transform_indices = @transform_13, window_bounds = array<i64: 8, 8, 32>}, {transform_indices = @transform_14, window_bounds = array<i64: 8, 8, 32>}, {transform_indices = @transform_15, window_bounds = array<i64: 8, 32>}]} {
    %c0 = arith.constant 0 : index
    %c0_0 = arith.constant 0 : index
    %0 = vector.load %arg2[%c0, %c0_0] : memref<8x1xi32, #tpu.memory_space<vmem>>, vector<8x1xi32>
    %c0_1 = arith.constant 0 : index
    %c0_2 = arith.constant 0 : index
    %1 = vector.load %arg3[%c0_1, %c0_2] : memref<64x32xf32, #tpu.memory_space<vmem>>, vector<64x32xf32>
    %c0_3 = arith.constant 0 : index
    %c0_4 = arith.constant 0 : index
    %c0_5 = arith.constant 0 : index
    %2 = vector.load %arg4[%c0_3, %c0_4, %c0_5] : memref<3x32x32xf32, #tpu.memory_space<vmem>>, vector<1x32x32xf32>
    %3 = vector.shape_cast %2 : vector<1x32x32xf32> to vector<32x32xf32>
    %c1 = arith.constant 1 : index
    %c0_6 = arith.constant 0 : index
    %c0_7 = arith.constant 0 : index
    %4 = vector.load %arg4[%c1, %c0_6, %c0_7] : memref<3x32x32xf32, #tpu.memory_space<vmem>>, vector<1x32x32xf32>
    %5 = vector.shape_cast %4 : vector<1x32x32xf32> to vector<32x32xf32>
    %c2 = arith.constant 2 : index
    %c0_8 = arith.constant 0 : index
    %c0_9 = arith.constant 0 : index
    %6 = vector.load %arg4[%c2, %c0_8, %c0_9] : memref<3x32x32xf32, #tpu.memory_space<vmem>>, vector<1x32x32xf32>
    %7 = vector.shape_cast %6 : vector<1x32x32xf32> to vector<32x32xf32>
    %c0_10 = arith.constant 0 : index
    %c0_11 = arith.constant 0 : index
    %c0_12 = arith.constant 0 : index
    %8 = vector.load %arg5[%c0_10, %c0_11, %c0_12] : memref<3x32x32xf32, #tpu.memory_space<vmem>>, vector<1x32x32xf32>
    %9 = vector.shape_cast %8 : vector<1x32x32xf32> to vector<32x32xf32>
    %c1_13 = arith.constant 1 : index
    %c0_14 = arith.constant 0 : index
    %c0_15 = arith.constant 0 : index
    %10 = vector.load %arg5[%c1_13, %c0_14, %c0_15] : memref<3x32x32xf32, #tpu.memory_space<vmem>>, vector<1x32x32xf32>
    %11 = vector.shape_cast %10 : vector<1x32x32xf32> to vector<32x32xf32>
    %c2_16 = arith.constant 2 : index
    %c0_17 = arith.constant 0 : index
    %c0_18 = arith.constant 0 : index
    %12 = vector.load %arg5[%c2_16, %c0_17, %c0_18] : memref<3x32x32xf32, #tpu.memory_space<vmem>>, vector<1x32x32xf32>
    %13 = vector.shape_cast %12 : vector<1x32x32xf32> to vector<32x32xf32>
    %c0_19 = arith.constant 0 : index
    %c0_20 = arith.constant 0 : index
    %c0_21 = arith.constant 0 : index
    %14 = vector.load %arg6[%c0_19, %c0_20, %c0_21] : memref<3x1x32xf32, #tpu.memory_space<vmem>>, vector<1x1x32xf32>
    %15 = vector.shape_cast %14 : vector<1x1x32xf32> to vector<1x32xf32>
    %c1_22 = arith.constant 1 : index
    %c0_23 = arith.constant 0 : index
    %c0_24 = arith.constant 0 : index
    %16 = vector.load %arg6[%c1_22, %c0_23, %c0_24] : memref<3x1x32xf32, #tpu.memory_space<vmem>>, vector<1x1x32xf32>
    %17 = vector.shape_cast %16 : vector<1x1x32xf32> to vector<1x32xf32>
    %c2_25 = arith.constant 2 : index
    %c0_26 = arith.constant 0 : index
    %c0_27 = arith.constant 0 : index
    %18 = vector.load %arg6[%c2_25, %c0_26, %c0_27] : memref<3x1x32xf32, #tpu.memory_space<vmem>>, vector<1x1x32xf32>
    %19 = vector.shape_cast %18 : vector<1x1x32xf32> to vector<1x32xf32>
    %c0_28 = arith.constant 0 : index
    %c0_29 = arith.constant 0 : index
    %c0_30 = arith.constant 0 : index
    %20 = vector.load %arg7[%c0_28, %c0_29, %c0_30] : memref<3x1x32xf32, #tpu.memory_space<vmem>>, vector<1x1x32xf32>
    %21 = vector.shape_cast %20 : vector<1x1x32xf32> to vector<1x32xf32>
    %c1_31 = arith.constant 1 : index
    %c0_32 = arith.constant 0 : index
    %c0_33 = arith.constant 0 : index
    %22 = vector.load %arg7[%c1_31, %c0_32, %c0_33] : memref<3x1x32xf32, #tpu.memory_space<vmem>>, vector<1x1x32xf32>
    %23 = vector.shape_cast %22 : vector<1x1x32xf32> to vector<1x32xf32>
    %c2_34 = arith.constant 2 : index
    %c0_35 = arith.constant 0 : index
    %c0_36 = arith.constant 0 : index
    %24 = vector.load %arg7[%c2_34, %c0_35, %c0_36] : memref<3x1x32xf32, #tpu.memory_space<vmem>>, vector<1x1x32xf32>
    %25 = vector.shape_cast %24 : vector<1x1x32xf32> to vector<1x32xf32>
    %c0_37 = arith.constant 0 : index
    %c0_38 = arith.constant 0 : index
    %c0_39 = arith.constant 0 : index
    %26 = vector.load %arg8[%c0_37, %c0_38, %c0_39] : memref<3x32x32xf32, #tpu.memory_space<vmem>>, vector<1x32x32xf32>
    %27 = vector.shape_cast %26 : vector<1x32x32xf32> to vector<32x32xf32>
    %c1_40 = arith.constant 1 : index
    %c0_41 = arith.constant 0 : index
    %c0_42 = arith.constant 0 : index
    %28 = vector.load %arg8[%c1_40, %c0_41, %c0_42] : memref<3x32x32xf32, #tpu.memory_space<vmem>>, vector<1x32x32xf32>
    %29 = vector.shape_cast %28 : vector<1x32x32xf32> to vector<32x32xf32>
    %c2_43 = arith.constant 2 : index
    %c0_44 = arith.constant 0 : index
    %c0_45 = arith.constant 0 : index
    %30 = vector.load %arg8[%c2_43, %c0_44, %c0_45] : memref<3x32x32xf32, #tpu.memory_space<vmem>>, vector<1x32x32xf32>
    %31 = vector.shape_cast %30 : vector<1x32x32xf32> to vector<32x32xf32>
    %c0_46 = arith.constant 0 : index
    %c0_47 = arith.constant 0 : index
    %c0_48 = arith.constant 0 : index
    %32 = vector.load %arg9[%c0_46, %c0_47, %c0_48] : memref<3x32x32xf32, #tpu.memory_space<vmem>>, vector<1x32x32xf32>
    %33 = vector.shape_cast %32 : vector<1x32x32xf32> to vector<32x32xf32>
    %c1_49 = arith.constant 1 : index
    %c0_50 = arith.constant 0 : index
    %c0_51 = arith.constant 0 : index
    %34 = vector.load %arg9[%c1_49, %c0_50, %c0_51] : memref<3x32x32xf32, #tpu.memory_space<vmem>>, vector<1x32x32xf32>
    %35 = vector.shape_cast %34 : vector<1x32x32xf32> to vector<32x32xf32>
    %c2_52 = arith.constant 2 : index
    %c0_53 = arith.constant 0 : index
    %c0_54 = arith.constant 0 : index
    %36 = vector.load %arg9[%c2_52, %c0_53, %c0_54] : memref<3x32x32xf32, #tpu.memory_space<vmem>>, vector<1x32x32xf32>
    %37 = vector.shape_cast %36 : vector<1x32x32xf32> to vector<32x32xf32>
    %c0_55 = arith.constant 0 : index
    %c0_56 = arith.constant 0 : index
    %c0_57 = arith.constant 0 : index
    %38 = vector.load %arg10[%c0_55, %c0_56, %c0_57] : memref<3x1x32xf32, #tpu.memory_space<vmem>>, vector<1x1x32xf32>
    %39 = vector.shape_cast %38 : vector<1x1x32xf32> to vector<1x32xf32>
    %c1_58 = arith.constant 1 : index
    %c0_59 = arith.constant 0 : index
    %c0_60 = arith.constant 0 : index
    %40 = vector.load %arg10[%c1_58, %c0_59, %c0_60] : memref<3x1x32xf32, #tpu.memory_space<vmem>>, vector<1x1x32xf32>
    %41 = vector.shape_cast %40 : vector<1x1x32xf32> to vector<1x32xf32>
    %c2_61 = arith.constant 2 : index
    %c0_62 = arith.constant 0 : index
    %c0_63 = arith.constant 0 : index
    %42 = vector.load %arg10[%c2_61, %c0_62, %c0_63] : memref<3x1x32xf32, #tpu.memory_space<vmem>>, vector<1x1x32xf32>
    %43 = vector.shape_cast %42 : vector<1x1x32xf32> to vector<1x32xf32>
    %c0_64 = arith.constant 0 : index
    %c0_65 = arith.constant 0 : index
    %c0_66 = arith.constant 0 : index
    %44 = vector.load %arg11[%c0_64, %c0_65, %c0_66] : memref<3x1x32xf32, #tpu.memory_space<vmem>>, vector<1x1x32xf32>
    %45 = vector.shape_cast %44 : vector<1x1x32xf32> to vector<1x32xf32>
    %c1_67 = arith.constant 1 : index
    %c0_68 = arith.constant 0 : index
    %c0_69 = arith.constant 0 : index
    %46 = vector.load %arg11[%c1_67, %c0_68, %c0_69] : memref<3x1x32xf32, #tpu.memory_space<vmem>>, vector<1x1x32xf32>
    %47 = vector.shape_cast %46 : vector<1x1x32xf32> to vector<1x32xf32>
    %c2_70 = arith.constant 2 : index
    %c0_71 = arith.constant 0 : index
    %c0_72 = arith.constant 0 : index
    %48 = vector.load %arg11[%c2_70, %c0_71, %c0_72] : memref<3x1x32xf32, #tpu.memory_space<vmem>>, vector<1x1x32xf32>
    %49 = vector.shape_cast %48 : vector<1x1x32xf32> to vector<1x32xf32>
    %cst = arith.constant 0.000000e+00 : f32
    %50 = vector.broadcast %cst : f32 to vector<8x32xf32>
    %c0_i32 = arith.constant 0 : i32
    %c8_i32 = arith.constant 8 : i32
    %51 = arith.addi %c0_i32, %c8_i32 : i32
    %c1_i32 = arith.constant 1 : i32
    %52 = scf.for %arg18 = %c0_i32 to %51 step %c1_i32 iter_args(%arg19 = %50) -> (vector<8x32xf32>)  : i32 {
      %67 = arith.index_cast %arg18 : i32 to index
      %c0_90 = arith.constant 0 : index
      %c0_91 = arith.constant 0 : index
      %68 = vector.load %arg1[%67, %c0_90, %c0_91] : memref<8x8x1xi32, #tpu.memory_space<vmem>>, vector<1x8x1xi32>
      %69 = vector.shape_cast %68 : vector<1x8x1xi32> to vector<8x1xi32>
      %70 = tpu.iota {dimensions = array<i32: 1>} : vector<8x64xi32>
      %71 = vector.broadcast %69 : vector<8x1xi32> to vector<8x64xi32>
      %72 = arith.cmpi eq, %70, %71 : vector<8x64xi32>
      %73 = arith.extui %72 : vector<8x64xi1> to vector<8x64xi32>
      %74 = arith.sitofp %73 : vector<8x64xi32> to vector<8x64xf32>
      %cst_92 = arith.constant dense<0.000000e+00> : vector<8x32xf32>
      %75 = tpu.matmul %74, %1, %cst_92 {dimension_numbers = #tpu.dot_dimension_numbers<[1], [0], [0], [1], [0, 0, 1, 1], [], []>} : vector<8x64xf32>, vector<64x32xf32>, vector<8x32xf32> -> vector<8x32xf32>
      %76 = arith.index_cast %arg18 : i32 to index
      %c0_93 = arith.constant 0 : index
      %c0_94 = arith.constant 0 : index
      %77 = vector.load %arg17[%76, %c0_93, %c0_94] : memref<8x8x32xf32, #tpu.memory_space<vmem>>, vector<1x8x32xf32>
      %78 = vector.shape_cast %77 : vector<1x8x32xf32> to vector<8x32xf32>
      %79 = vector.shape_cast %75 : vector<8x32xf32> to vector<1x8x32xf32>
      tpu.vector_store %arg17[%76, %c0_93, %c0_94], %79 {strides = array<i32>} : memref<8x8x32xf32, #tpu.memory_space<vmem>>, vector<1x8x32xf32>,
      %cst_95 = arith.constant dense<0.000000e+00> : vector<8x32xf32>
      %80 = tpu.matmul %75, %3, %cst_95 {dimension_numbers = #tpu.dot_dimension_numbers<[1], [0], [0], [1], [0, 0, 1, 1], [], []>} : vector<8x32xf32>, vector<32x32xf32>, vector<8x32xf32> -> vector<8x32xf32>
      %81 = vector.broadcast %15 : vector<1x32xf32> to vector<8x32xf32>
      %82 = arith.addf %80, %81 : vector<8x32xf32>
      %cst_96 = arith.constant dense<0.000000e+00> : vector<8x32xf32>
      %83 = tpu.matmul %75, %5, %cst_96 {dimension_numbers = #tpu.dot_dimension_numbers<[1], [0], [0], [1], [0, 0, 1, 1], [], []>} : vector<8x32xf32>, vector<32x32xf32>, vector<8x32xf32> -> vector<8x32xf32>
      %84 = vector.broadcast %17 : vector<1x32xf32> to vector<8x32xf32>
      %85 = arith.addf %83, %84 : vector<8x32xf32>
      %cst_97 = arith.constant dense<0.000000e+00> : vector<8x32xf32>
      %86 = tpu.matmul %75, %7, %cst_97 {dimension_numbers = #tpu.dot_dimension_numbers<[1], [0], [0], [1], [0, 0, 1, 1], [], []>} : vector<8x32xf32>, vector<32x32xf32>, vector<8x32xf32> -> vector<8x32xf32>
      %87 = vector.broadcast %19 : vector<1x32xf32> to vector<8x32xf32>
      %88 = arith.addf %86, %87 : vector<8x32xf32>
      %cst_98 = arith.constant dense<0.000000e+00> : vector<8x32xf32>
      %89 = tpu.matmul %arg19, %9, %cst_98 {dimension_numbers = #tpu.dot_dimension_numbers<[1], [0], [0], [1], [0, 0, 1, 1], [], []>} : vector<8x32xf32>, vector<32x32xf32>, vector<8x32xf32> -> vector<8x32xf32>
      %90 = vector.broadcast %21 : vector<1x32xf32> to vector<8x32xf32>
      %91 = arith.addf %89, %90 : vector<8x32xf32>
      %cst_99 = arith.constant dense<0.000000e+00> : vector<8x32xf32>
      %92 = tpu.matmul %arg19, %11, %cst_99 {dimension_numbers = #tpu.dot_dimension_numbers<[1], [0], [0], [1], [0, 0, 1, 1], [], []>} : vector<8x32xf32>, vector<32x32xf32>, vector<8x32xf32> -> vector<8x32xf32>
      %93 = vector.broadcast %23 : vector<1x32xf32> to vector<8x32xf32>
      %94 = arith.addf %92, %93 : vector<8x32xf32>
      %cst_100 = arith.constant dense<0.000000e+00> : vector<8x32xf32>
      %95 = tpu.matmul %arg19, %13, %cst_100 {dimension_numbers = #tpu.dot_dimension_numbers<[1], [0], [0], [1], [0, 0, 1, 1], [], []>} : vector<8x32xf32>, vector<32x32xf32>, vector<8x32xf32> -> vector<8x32xf32>
      %96 = vector.broadcast %25 : vector<1x32xf32> to vector<8x32xf32>
      %97 = arith.addf %95, %96 : vector<8x32xf32>
      %98 = arith.addf %82, %91 : vector<8x32xf32>
      %99 = arith.negf %98 : vector<8x32xf32>
      %100 = math.exp %99 : vector<8x32xf32>
      %cst_101 = arith.constant 1.000000e+00 : f32
      %101 = vector.broadcast %cst_101 : f32 to vector<8x32xf32>
      %102 = arith.addf %101, %100 : vector<8x32xf32>
      %103 = arith.divf %101, %102 : vector<8x32xf32>
      %104 = arith.addf %85, %94 : vector<8x32xf32>
      %105 = arith.negf %104 : vector<8x32xf32>
      %106 = math.exp %105 : vector<8x32xf32>
      %cst_102 = arith.constant 1.000000e+00 : f32
      %107 = vector.broadcast %cst_102 : f32 to vector<8x32xf32>
      %108 = arith.addf %107, %106 : vector<8x32xf32>
      %109 = arith.divf %107, %108 : vector<8x32xf32>
      %110 = arith.mulf %103, %97 : vector<8x32xf32>
      %111 = arith.addf %88, %110 : vector<8x32xf32>
      %112 = math.tanh %111 : vector<8x32xf32>
      %cst_103 = arith.constant 1.000000e+00 : f32
      %113 = vector.broadcast %cst_103 : f32 to vector<8x32xf32>
      %114 = arith.subf %113, %109 : vector<8x32xf32>
      %115 = arith.mulf %114, %112 : vector<8x32xf32>
      %116 = arith.mulf %109, %arg19 : vector<8x32xf32>
      %117 = arith.addf %115, %116 : vector<8x32xf32>
      %118 = vector.broadcast %arg18 : i32 to vector<8x1xi32>
      %119 = arith.cmpi slt, %118, %0 : vector<8x1xi32>
      %120 = vector.shape_cast %119 : vector<8x1xi1> to vector<8x1xi1>
      %121 = vector.broadcast %120 : vector<8x1xi1> to vector<8x32xi1>
      %122 = arith.select %121, %117, %arg19 : vector<8x32xi1>, vector<8x32xf32>
      %cst_104 = arith.constant 0.000000e+00 : f32
      %123 = vector.shape_cast %119 : vector<8x1xi1> to vector<8x1xi1>
      %124 = vector.broadcast %123 : vector<8x1xi1> to vector<8x32xi1>
      %125 = vector.broadcast %cst_104 : f32 to vector<8x32xf32>
      %126 = arith.select %124, %122, %125 : vector<8x32xi1>, vector<8x32xf32>
      %127 = arith.index_cast %arg18 : i32 to index
      %c0_105 = arith.constant 0 : index
      %c0_106 = arith.constant 0 : index
      %128 = vector.load %arg14[%127, %c0_105, %c0_106] : memref<8x8x32xf32, #tpu.memory_space<vmem>>, vector<1x8x32xf32>
      %129 = vector.shape_cast %128 : vector<1x8x32xf32> to vector<8x32xf32>
      %130 = vector.shape_cast %126 : vector<8x32xf32> to vector<1x8x32xf32>
      tpu.vector_store %arg14[%127, %c0_105, %c0_106], %130 {strides = array<i32>} : memref<8x8x32xf32, #tpu.memory_space<vmem>>, vector<1x8x32xf32>,
      scf.yield %122 : vector<8x32xf32>
    }
    %c8_i32_73 = arith.constant 8 : i32
    %c0_i32_74 = arith.constant 0 : i32
    %c8_i32_75 = arith.constant 8 : i32
    %53 = arith.addi %c0_i32_74, %c8_i32_75 : i32
    %c1_i32_76 = arith.constant 1 : i32
    %54 = scf.for %arg18 = %c0_i32_74 to %53 step %c1_i32_76 iter_args(%arg19 = %50) -> (vector<8x32xf32>)  : i32 {
      %c7_i32 = arith.constant 7 : i32
      %67 = arith.subi %c7_i32, %arg18 : i32
      %68 = arith.index_cast %67 : i32 to index
      %c0_90 = arith.constant 0 : index
      %c0_91 = arith.constant 0 : index
      %69 = vector.load %arg17[%68, %c0_90, %c0_91] : memref<8x8x32xf32, #tpu.memory_space<vmem>>, vector<1x8x32xf32>
      %70 = vector.shape_cast %69 : vector<1x8x32xf32> to vector<8x32xf32>
      %cst_92 = arith.constant dense<0.000000e+00> : vector<8x32xf32>
      %71 = tpu.matmul %70, %27, %cst_92 {dimension_numbers = #tpu.dot_dimension_numbers<[1], [0], [0], [1], [0, 0, 1, 1], [], []>} : vector<8x32xf32>, vector<32x32xf32>, vector<8x32xf32> -> vector<8x32xf32>
      %72 = vector.broadcast %39 : vector<1x32xf32> to vector<8x32xf32>
      %73 = arith.addf %71, %72 : vector<8x32xf32>
      %cst_93 = arith.constant dense<0.000000e+00> : vector<8x32xf32>
      %74 = tpu.matmul %70, %29, %cst_93 {dimension_numbers = #tpu.dot_dimension_numbers<[1], [0], [0], [1], [0, 0, 1, 1], [], []>} : vector<8x32xf32>, vector<32x32xf32>, vector<8x32xf32> -> vector<8x32xf32>
      %75 = vector.broadcast %41 : vector<1x32xf32> to vector<8x32xf32>
      %76 = arith.addf %74, %75 : vector<8x32xf32>
      %cst_94 = arith.constant dense<0.000000e+00> : vector<8x32xf32>
      %77 = tpu.matmul %70, %31, %cst_94 {dimension_numbers = #tpu.dot_dimension_numbers<[1], [0], [0], [1], [0, 0, 1, 1], [], []>} : vector<8x32xf32>, vector<32x32xf32>, vector<8x32xf32> -> vector<8x32xf32>
      %78 = vector.broadcast %43 : vector<1x32xf32> to vector<8x32xf32>
      %79 = arith.addf %77, %78 : vector<8x32xf32>
      %cst_95 = arith.constant dense<0.000000e+00> : vector<8x32xf32>
      %80 = tpu.matmul %arg19, %33, %cst_95 {dimension_numbers = #tpu.dot_dimension_numbers<[1], [0], [0], [1], [0, 0, 1, 1], [], []>} : vector<8x32xf32>, vector<32x32xf32>, vector<8x32xf32> -> vector<8x32xf32>
      %81 = vector.broadcast %45 : vector<1x32xf32> to vector<8x32xf32>
      %82 = arith.addf %80, %81 : vector<8x32xf32>
      %cst_96 = arith.constant dense<0.000000e+00> : vector<8x32xf32>
      %83 = tpu.matmul %arg19, %35, %cst_96 {dimension_numbers = #tpu.dot_dimension_numbers<[1], [0], [0], [1], [0, 0, 1, 1], [], []>} : vector<8x32xf32>, vector<32x32xf32>, vector<8x32xf32> -> vector<8x32xf32>
      %84 = vector.broadcast %47 : vector<1x32xf32> to vector<8x32xf32>
      %85 = arith.addf %83, %84 : vector<8x32xf32>
      %cst_97 = arith.constant dense<0.000000e+00> : vector<8x32xf32>
      %86 = tpu.matmul %arg19, %37, %cst_97 {dimension_numbers = #tpu.dot_dimension_numbers<[1], [0], [0], [1], [0, 0, 1, 1], [], []>} : vector<8x32xf32>, vector<32x32xf32>, vector<8x32xf32> -> vector<8x32xf32>
      %87 = vector.broadcast %49 : vector<1x32xf32> to vector<8x32xf32>
      %88 = arith.addf %86, %87 : vector<8x32xf32>
      %89 = arith.addf %73, %82 : vector<8x32xf32>
      %90 = arith.negf %89 : vector<8x32xf32>
      %91 = math.exp %90 : vector<8x32xf32>
      %cst_98 = arith.constant 1.000000e+00 : f32
      %92 = vector.broadcast %cst_98 : f32 to vector<8x32xf32>
      %93 = arith.addf %92, %91 : vector<8x32xf32>
      %94 = arith.divf %92, %93 : vector<8x32xf32>
      %95 = arith.addf %76, %85 : vector<8x32xf32>
      %96 = arith.negf %95 : vector<8x32xf32>
      %97 = math.exp %96 : vector<8x32xf32>
      %cst_99 = arith.constant 1.000000e+00 : f32
      %98 = vector.broadcast %cst_99 : f32 to vector<8x32xf32>
      %99 = arith.addf %98, %97 : vector<8x32xf32>
      %100 = arith.divf %98, %99 : vector<8x32xf32>
      %101 = arith.mulf %94, %88 : vector<8x32xf32>
      %102 = arith.addf %79, %101 : vector<8x32xf32>
      %103 = math.tanh %102 : vector<8x32xf32>
      %cst_100 = arith.constant 1.000000e+00 : f32
      %104 = vector.broadcast %cst_100 : f32 to vector<8x32xf32>
      %105 = arith.subf %104, %100 : vector<8x32xf32>
      %106 = arith.mulf %105, %103 : vector<8x32xf32>
      %107 = arith.mulf %100, %arg19 : vector<8x32xf32>
      %108 = arith.addf %106, %107 : vector<8x32xf32>
      %109 = vector.broadcast %67 : i32 to vector<8x1xi32>
      %110 = arith.cmpi slt, %109, %0 : vector<8x1xi32>
      %cst_101 = arith.constant 0.000000e+00 : f32
      %111 = vector.shape_cast %110 : vector<8x1xi1> to vector<8x1xi1>
      %112 = vector.broadcast %111 : vector<8x1xi1> to vector<8x32xi1>
      %113 = vector.broadcast %cst_101 : f32 to vector<8x32xf32>
      %114 = arith.select %112, %108, %113 : vector<8x32xi1>, vector<8x32xf32>
      %115 = arith.index_cast %67 : i32 to index
      %c0_102 = arith.constant 0 : index
      %c0_103 = arith.constant 0 : index
      %116 = vector.load %arg15[%115, %c0_102, %c0_103] : memref<8x8x32xf32, #tpu.memory_space<vmem>>, vector<1x8x32xf32>
      %117 = vector.shape_cast %116 : vector<1x8x32xf32> to vector<8x32xf32>
      %118 = vector.shape_cast %114 : vector<8x32xf32> to vector<1x8x32xf32>
      tpu.vector_store %arg15[%115, %c0_102, %c0_103], %118 {strides = array<i32>} : memref<8x8x32xf32, #tpu.memory_space<vmem>>, vector<1x8x32xf32>,
      scf.yield %114 : vector<8x32xf32>
    }
    %c8_i32_77 = arith.constant 8 : i32
    %c0_78 = arith.constant 0 : index
    %c0_79 = arith.constant 0 : index
    %c0_80 = arith.constant 0 : index
    %55 = vector.load %arg12[%c0_78, %c0_79, %c0_80] : memref<2x32x32xf32, #tpu.memory_space<vmem>>, vector<1x32x32xf32>
    %56 = vector.shape_cast %55 : vector<1x32x32xf32> to vector<32x32xf32>
    %cst_81 = arith.constant dense<0.000000e+00> : vector<8x32xf32>
    %57 = tpu.matmul %52, %56, %cst_81 {dimension_numbers = #tpu.dot_dimension_numbers<[1], [0], [0], [1], [0, 0, 1, 1], [], []>} : vector<8x32xf32>, vector<32x32xf32>, vector<8x32xf32> -> vector<8x32xf32>
    %c1_82 = arith.constant 1 : index
    %c0_83 = arith.constant 0 : index
    %c0_84 = arith.constant 0 : index
    %58 = vector.load %arg12[%c1_82, %c0_83, %c0_84] : memref<2x32x32xf32, #tpu.memory_space<vmem>>, vector<1x32x32xf32>
    %59 = vector.shape_cast %58 : vector<1x32x32xf32> to vector<32x32xf32>
    %cst_85 = arith.constant dense<0.000000e+00> : vector<8x32xf32>
    %60 = tpu.matmul %54, %59, %cst_85 {dimension_numbers = #tpu.dot_dimension_numbers<[1], [0], [0], [1], [0, 0, 1, 1], [], []>} : vector<8x32xf32>, vector<32x32xf32>, vector<8x32xf32> -> vector<8x32xf32>
    %61 = arith.addf %57, %60 : vector<8x32xf32>
    %c0_86 = arith.constant 0 : index
    %c0_87 = arith.constant 0 : index
    %62 = vector.load %arg13[%c0_86, %c0_87] : memref<1x32xf32, #tpu.memory_space<vmem>>, vector<1x32xf32>
    %63 = vector.broadcast %62 : vector<1x32xf32> to vector<8x32xf32>
    %64 = arith.addf %61, %63 : vector<8x32xf32>
    %65 = math.tanh %64 : vector<8x32xf32>
    %c0_88 = arith.constant 0 : index
    %c0_89 = arith.constant 0 : index
    %66 = vector.load %arg16[%c0_88, %c0_89] : memref<8x32xf32, #tpu.memory_space<vmem>>, vector<8x32xf32>
    tpu.vector_store %arg16[%c0_88, %c0_89], %65 {strides = array<i32>} : memref<8x32xf32, #tpu.memory_space<vmem>>, vector<8x32xf32>,
    return
  }
  func.func @transform_0(%arg0: i32) -> (i32, i32, i32) {
    %c0_i32 = arith.constant 0 : i32
    %c0_i32_0 = arith.constant 0 : i32
    %c0_i32_1 = arith.constant 0 : i32
    return %c0_i32, %arg0, %c0_i32_0 : i32, i32, i32
  }
  func.func @transform_1(%arg0: i32) -> (i32, i32) {
    %c0_i32 = arith.constant 0 : i32
    %c0_i32_0 = arith.constant 0 : i32
    return %arg0, %c0_i32 : i32, i32
  }
  func.func @transform_2(%arg0: i32) -> (i32, i32) {
    %c0_i32 = arith.constant 0 : i32
    %c0_i32_0 = arith.constant 0 : i32
    %c0_i32_1 = arith.constant 0 : i32
    return %c0_i32, %c0_i32_0 : i32, i32
  }
  func.func @transform_3(%arg0: i32) -> (i32, i32, i32) {
    %c0_i32 = arith.constant 0 : i32
    %c0_i32_0 = arith.constant 0 : i32
    %c0_i32_1 = arith.constant 0 : i32
    %c0_i32_2 = arith.constant 0 : i32
    return %c0_i32, %c0_i32_0, %c0_i32_1 : i32, i32, i32
  }
  func.func @transform_4(%arg0: i32) -> (i32, i32, i32) {
    %c0_i32 = arith.constant 0 : i32
    %c0_i32_0 = arith.constant 0 : i32
    %c0_i32_1 = arith.constant 0 : i32
    %c0_i32_2 = arith.constant 0 : i32
    return %c0_i32, %c0_i32_0, %c0_i32_1 : i32, i32, i32
  }
  func.func @transform_5(%arg0: i32) -> (i32, i32, i32) {
    %c0_i32 = arith.constant 0 : i32
    %c0_i32_0 = arith.constant 0 : i32
    %c0_i32_1 = arith.constant 0 : i32
    %c0_i32_2 = arith.constant 0 : i32
    return %c0_i32, %c0_i32_0, %c0_i32_1 : i32, i32, i32
  }
  func.func @transform_6(%arg0: i32) -> (i32, i32, i32) {
    %c0_i32 = arith.constant 0 : i32
    %c0_i32_0 = arith.constant 0 : i32
    %c0_i32_1 = arith.constant 0 : i32
    %c0_i32_2 = arith.constant 0 : i32
    return %c0_i32, %c0_i32_0, %c0_i32_1 : i32, i32, i32
  }
  func.func @transform_7(%arg0: i32) -> (i32, i32, i32) {
    %c0_i32 = arith.constant 0 : i32
    %c0_i32_0 = arith.constant 0 : i32
    %c0_i32_1 = arith.constant 0 : i32
    %c0_i32_2 = arith.constant 0 : i32
    return %c0_i32, %c0_i32_0, %c0_i32_1 : i32, i32, i32
  }
  func.func @transform_8(%arg0: i32) -> (i32, i32, i32) {
    %c0_i32 = arith.constant 0 : i32
    %c0_i32_0 = arith.constant 0 : i32
    %c0_i32_1 = arith.constant 0 : i32
    %c0_i32_2 = arith.constant 0 : i32
    return %c0_i32, %c0_i32_0, %c0_i32_1 : i32, i32, i32
  }
  func.func @transform_9(%arg0: i32) -> (i32, i32, i32) {
    %c0_i32 = arith.constant 0 : i32
    %c0_i32_0 = arith.constant 0 : i32
    %c0_i32_1 = arith.constant 0 : i32
    %c0_i32_2 = arith.constant 0 : i32
    return %c0_i32, %c0_i32_0, %c0_i32_1 : i32, i32, i32
  }
  func.func @transform_10(%arg0: i32) -> (i32, i32, i32) {
    %c0_i32 = arith.constant 0 : i32
    %c0_i32_0 = arith.constant 0 : i32
    %c0_i32_1 = arith.constant 0 : i32
    %c0_i32_2 = arith.constant 0 : i32
    return %c0_i32, %c0_i32_0, %c0_i32_1 : i32, i32, i32
  }
  func.func @transform_11(%arg0: i32) -> (i32, i32, i32) {
    %c0_i32 = arith.constant 0 : i32
    %c0_i32_0 = arith.constant 0 : i32
    %c0_i32_1 = arith.constant 0 : i32
    %c0_i32_2 = arith.constant 0 : i32
    return %c0_i32, %c0_i32_0, %c0_i32_1 : i32, i32, i32
  }
  func.func @transform_12(%arg0: i32) -> (i32, i32) {
    %c0_i32 = arith.constant 0 : i32
    %c0_i32_0 = arith.constant 0 : i32
    %c0_i32_1 = arith.constant 0 : i32
    return %c0_i32, %c0_i32_0 : i32, i32
  }
  func.func @transform_13(%arg0: i32) -> (i32, i32, i32) {
    %c0_i32 = arith.constant 0 : i32
    %c0_i32_0 = arith.constant 0 : i32
    %c0_i32_1 = arith.constant 0 : i32
    return %c0_i32, %arg0, %c0_i32_0 : i32, i32, i32
  }
  func.func @transform_14(%arg0: i32) -> (i32, i32, i32) {
    %c0_i32 = arith.constant 0 : i32
    %c0_i32_0 = arith.constant 0 : i32
    %c0_i32_1 = arith.constant 0 : i32
    return %c0_i32, %arg0, %c0_i32_0 : i32, i32, i32
  }
  func.func @transform_15(%arg0: i32) -> (i32, i32) {
    %c0_i32 = arith.constant 0 : i32
    %c0_i32_0 = arith.constant 0 : i32
    return %arg0, %c0_i32 : i32, i32
  }
}

</mosaic_0001>

<llo_original>
// kernel: tpu_custom_call.1
$region0: #{tpu_custom_call.1}
  #allocation0 [shape = 'u32[]', space=smem, size = 0x4, offset = 0x4, fixed_abs, tag = 'smem constant byte address 0x4 - core index']
  #allocation1 [shape = 'u32[72,128]{1,0:T(1,128)}', space=vmem, size = 0x9000, scoped, tag = 'internal scratch']
  #allocation2 [shape = 'f32[8,8,32]{2,1,0:T(8,128)}', space=vmem, size = 0x8000, scoped, tag = 'scratch operand']
  %s0 = inlined_call_operand.vmem [shape: s32[8,8,1], index: 0, kind: input, shape index: {}]
  %s1 = inlined_call_operand.vmem [shape: s32[8,1], index: 1, kind: input, shape index: {}]
  %s2 = inlined_call_operand.vmem [shape: f32[64,32], index: 2, kind: input, shape index: {}]
  %s3 = inlined_call_operand.vmem [shape: f32[3,32,32], index: 3, kind: input, shape index: {}]
  %s4 = inlined_call_operand.hbm [shape: f32[3,32,32], index: 4, kind: input, shape index: {}]
  %s5 = inlined_call_operand.vmem [shape: f32[3,1,32], index: 5, kind: input, shape index: {}]
  %s6 = inlined_call_operand.vmem [shape: f32[3,1,32], index: 6, kind: input, shape index: {}]
  %s7 = inlined_call_operand.hbm [shape: f32[3,32,32], index: 7, kind: input, shape index: {}]
  %s8 = inlined_call_operand.hbm [shape: f32[3,32,32], index: 8, kind: input, shape index: {}]
  %s9 = inlined_call_operand.vmem [shape: f32[3,1,32], index: 9, kind: input, shape index: {}]
  %s10 = inlined_call_operand.vmem [shape: f32[3,1,32], index: 10, kind: input, shape index: {}]
  %s11 = inlined_call_operand.hbm [shape: f32[2,32,32], index: 11, kind: input, shape index: {}]
  %s12 = inlined_call_operand.vmem [shape: f32[1,32], index: 12, kind: input, shape index: {}]
  %s13 = inlined_call_operand.hbm [shape: f32[8,8,32], index: 13, kind: output, shape index: {0}]
  %s14 = inlined_call_operand.hbm [shape: f32[8,8,32], index: 14, kind: output, shape index: {1}]
  %s15 = inlined_call_operand.hbm [shape: f32[8,32], index: 15, kind: output, shape index: {2}]
  %16 = xla_tuple %s13, %s14, %s15
  %s17 = sld [smem:[#allocation0]]
  $region108: #{tpu_custom_call.1} parent=0
    _
  %s19 = ssub.s32 1, %s17
  %s20 = scalar_select 0, %s19, %s17
  $region1: #{tpu_custom_call.1} parent=0
    #allocation3 [shape = 'u8[49152]{0}', space=vmem, size = 0xc000, scoped, tag = 'input window, operand 4, single buffered']
    #allocation4 [shape = 's32[1]{0}', space=sflag, size = 0x4, scoped, tag = 'scoped memory for tpu_custom_call.1']
    #allocation5 [shape = 's32[1]{0}', space=sflag, size = 0x4, scoped, tag = 'scoped memory for tpu_custom_call.1']
    #allocation6 [shape = 'u8[49152]{0}', space=vmem, size = 0xc000, scoped, tag = 'input window, operand 7, single buffered']
    #allocation7 [shape = 's32[1]{0}', space=sflag, size = 0x4, scoped, tag = 'scoped memory for tpu_custom_call.1']
    #allocation8 [shape = 'u8[49152]{0}', space=vmem, size = 0xc000, scoped, tag = 'input window, operand 8, single buffered']
    #allocation9 [shape = 'u8[32768]{0}', space=vmem, size = 0x8000, scoped, tag = 'input window, operand 11, single buffered']
    #allocation10 [shape = 's32[1]{0}', space=sflag, size = 0x4, scoped, tag = 'scoped memory for tpu_custom_call.1']
    #allocation11 [shape = 'u8[32768]{0}', space=vmem, size = 0x8000, scoped, tag = 'output window, operand 0, single buffered']
    #allocation12 [shape = 'u8[32768]{0}', space=vmem, size = 0x8000, scoped, tag = 'output window, operand 1, single buffered']
    #allocation13 [shape = 's32[1]{0}', space=sflag, size = 0x4, scoped, tag = 'scoped memory for tpu_custom_call.1']
    #allocation14 [shape = 'u8[4096]{0}', space=vmem, size = 0x1000, scoped, tag = 'output window, operand 2, single buffered']
    %21 = vsyncpa [#allocation4], 0
    %22 = vsyncpa [#allocation7], 0
    %23 = vsyncpa [#allocation10], 0
    %24 = vsyncpa [#allocation5], 0
    %25 = vsyncpa [#allocation13], 0
    // Predicated region
    $region2: #{tpu_custom_call.1} parent=1 // pred_check
      _
    $region3: #{tpu_custom_call.1} parent=1 // pred_check_branch
      %27 = sbr.rel (0) target = $region5
    $region4: #{tpu_custom_call.1} parent=1 // pred_region
      _
    $region5: #{tpu_custom_call.1} parent=1 // pred_fallthru
      _
    // Predicated region
    $region6: #{tpu_custom_call.1} parent=1 // pred_check
      _
    $region7: #{tpu_custom_call.1} parent=1 // pred_check_branch
      %29 = sbr.rel (0) target = $region9
    $region8: #{tpu_custom_call.1} parent=1 // pred_region
      _
    $region9: #{tpu_custom_call.1} parent=1 // pred_fallthru
      _
    // Predicated region
    $region10: #{tpu_custom_call.1} parent=1 // pred_check
      _
    $region11: #{tpu_custom_call.1} parent=1 // pred_check_branch
      %31 = sbr.rel (0) target = $region13
    $region12: #{tpu_custom_call.1} parent=1 // pred_region
      _
    $region13: #{tpu_custom_call.1} parent=1 // pred_fallthru
      _
    // Predicated region
    $region14: #{tpu_custom_call.1} parent=1 // pred_check
      _
    $region15: #{tpu_custom_call.1} parent=1 // pred_check_branch
      %33 = sbr.rel (0) target = $region17
    $region16: #{tpu_custom_call.1} parent=1 // pred_region
      _
    $region17: #{tpu_custom_call.1} parent=1 // pred_fallthru
      _
    // Predicated region
    $region18: #{tpu_custom_call.1} parent=1 // pred_check
      _
    $region19: #{tpu_custom_call.1} parent=1 // pred_check_branch
      %35 = sbr.rel (0) target = $region21
    $region20: #{tpu_custom_call.1} parent=1 // pred_region
      %37 = vsyncadd [#allocation4], 0
      %s38 = sshll.u32 %s4, 4
      %s39 = int_to_ptr.hbm [resolvable:$true] %s38
      %s40 = sshll.u32 [#allocation3], 4
      %s41 = int_to_ptr.vmem [resolvable:$true] %s40
      %46 = dma.hbm_to_vmem [thread:$0]  %s39, 1536, %s41, [#allocation4], 128, 128, 8
    $region21: #{tpu_custom_call.1} parent=1 // pred_fallthru
      _
    // Predicated region
    $region22: #{tpu_custom_call.1} parent=1 // pred_check
      _
    $region23: #{tpu_custom_call.1} parent=1 // pred_check_branch
      %48 = sbr.rel (0) target = $region25
    $region24: #{tpu_custom_call.1} parent=1 // pred_region
      _
    $region25: #{tpu_custom_call.1} parent=1 // pred_fallthru
      _
    // Predicated region
    $region26: #{tpu_custom_call.1} parent=1 // pred_check
      _
    $region27: #{tpu_custom_call.1} parent=1 // pred_check_branch
      %50 = sbr.rel (0) target = $region29
    $region28: #{tpu_custom_call.1} parent=1 // pred_region
      _
    $region29: #{tpu_custom_call.1} parent=1 // pred_fallthru
      _
    // Predicated region
    $region30: #{tpu_custom_call.1} parent=1 // pred_check
      _
    $region31: #{tpu_custom_call.1} parent=1 // pred_check_branch
      %52 = sbr.rel (0) target = $region33
    $region32: #{tpu_custom_call.1} parent=1 // pred_region
      %54 = vsyncadd [#allocation7], 0
      %s55 = sshll.u32 %s7, 4
      %s56 = int_to_ptr.hbm [resolvable:$true] %s55
      %s57 = sshll.u32 [#allocation6], 4
      %s58 = int_to_ptr.vmem [resolvable:$true] %s57
      %63 = dma.hbm_to_vmem [thread:$0]  %s56, 1536, %s58, [#allocation7], 128, 128, 8
    $region33: #{tpu_custom_call.1} parent=1 // pred_fallthru
      _
    // Predicated region
    $region34: #{tpu_custom_call.1} parent=1 // pred_check
      _
    $region35: #{tpu_custom_call.1} parent=1 // pred_check_branch
      %65 = sbr.rel (0) target = $region37
    $region36: #{tpu_custom_call.1} parent=1 // pred_region
      %67 = vsyncadd [#allocation7], 0
      %s68 = sshll.u32 %s8, 4
      %s69 = int_to_ptr.hbm [resolvable:$true] %s68
      %s70 = sshll.u32 [#allocation8], 4
      %s71 = int_to_ptr.vmem [resolvable:$true] %s70
      %76 = dma.hbm_to_vmem [thread:$0]  %s69, 1536, %s71, [#allocation7], 128, 128, 8
    $region37: #{tpu_custom_call.1} parent=1 // pred_fallthru
      _
    // Predicated region
    $region38: #{tpu_custom_call.1} parent=1 // pred_check
      _
    $region39: #{tpu_custom_call.1} parent=1 // pred_check_branch
      %78 = sbr.rel (0) target = $region41
    $region40: #{tpu_custom_call.1} parent=1 // pred_region
      _
    $region41: #{tpu_custom_call.1} parent=1 // pred_fallthru
      _
    // Predicated region
    $region42: #{tpu_custom_call.1} parent=1 // pred_check
      _
    $region43: #{tpu_custom_call.1} parent=1 // pred_check_branch
      %80 = sbr.rel (0) target = $region45
    $region44: #{tpu_custom_call.1} parent=1 // pred_region
      _
    $region45: #{tpu_custom_call.1} parent=1 // pred_fallthru
      _
    // Predicated region
    $region46: #{tpu_custom_call.1} parent=1 // pred_check
      _
    $region47: #{tpu_custom_call.1} parent=1 // pred_check_branch
      %82 = sbr.rel (0) target = $region49
    $region48: #{tpu_custom_call.1} parent=1 // pred_region
      %84 = vsyncadd [#allocation10], 0
      %s85 = sshll.u32 %s11, 4
      %s86 = int_to_ptr.hbm [resolvable:$true] %s85
      %s87 = sshll.u32 [#allocation9], 4
      %s88 = int_to_ptr.vmem [resolvable:$true] %s87
      %93 = dma.hbm_to_vmem [thread:$0]  %s86, 1024, %s88, [#allocation10], 128, 128, 8
    $region49: #{tpu_custom_call.1} parent=1 // pred_fallthru
      _
    // Predicated region
    $region50: #{tpu_custom_call.1} parent=1 // pred_check
      _
    $region51: #{tpu_custom_call.1} parent=1 // pred_check_branch
      %95 = sbr.rel (0) target = $region53
    $region52: #{tpu_custom_call.1} parent=1 // pred_region
      _
    $region53: #{tpu_custom_call.1} parent=1 // pred_fallthru
      _
    // Predicated region
    $region54: #{tpu_custom_call.1} parent=1 // pred_check
      _
    $region55: #{tpu_custom_call.1} parent=1 // pred_check_branch
      %97 = sbr.rel (0) target = $region57
    $region56: #{tpu_custom_call.1} parent=1 // pred_region
      %99 = dma.done [#allocation4], 1536
    $region57: #{tpu_custom_call.1} parent=1 // pred_fallthru
      _
    // Predicated region
    $region58: #{tpu_custom_call.1} parent=1 // pred_check
      _
    $region59: #{tpu_custom_call.1} parent=1 // pred_check_branch
      %101 = sbr.rel (0) target = $region61
    $region60: #{tpu_custom_call.1} parent=1 // pred_region
      %103 = dma.done [#allocation7], 1536
    $region61: #{tpu_custom_call.1} parent=1 // pred_fallthru
      _
    // Predicated region
    $region62: #{tpu_custom_call.1} parent=1 // pred_check
      _
    $region63: #{tpu_custom_call.1} parent=1 // pred_check_branch
      %105 = sbr.rel (0) target = $region65
    $region64: #{tpu_custom_call.1} parent=1 // pred_region
      %107 = dma.done [#allocation7], 1536
    $region65: #{tpu_custom_call.1} parent=1 // pred_fallthru
      _
    // Predicated region
    $region66: #{tpu_custom_call.1} parent=1 // pred_check
      _
    $region67: #{tpu_custom_call.1} parent=1 // pred_check_branch
      %109 = sbr.rel (0) target = $region69
    $region68: #{tpu_custom_call.1} parent=1 // pred_region
      %111 = dma.done [#allocation10], 1024
    $region69: #{tpu_custom_call.1} parent=1 // pred_fallthru
      _
    %v112 = vld [vmem:[%s1] sm:$0xff]
    %v113 = vld [vmem:[%s2] sm:$0xff]
    %v114 = vld [vmem:[%s2 + $0x8] sm:$0xff]
    %v115 = vld [vmem:[%s2 + $0x10] sm:$0xff]
    %v116 = vld [vmem:[%s2 + $0x18] sm:$0xff]
    %v117 = vld [vmem:[%s2 + $0x20] sm:$0xff]
    %v118 = vld [vmem:[%s2 + $0x28] sm:$0xff]
    %v119 = vld [vmem:[%s2 + $0x30] sm:$0xff]
    %v120 = vld [vmem:[%s2 + $0x38] sm:$0xff]
    %v121 = vld [vmem:[%s3] sm:$0xff]
    %v122 = vld [vmem:[%s3 + $0x8] sm:$0xff]
    %v123 = vld [vmem:[%s3 + $0x10] sm:$0xff]
    %v124 = vld [vmem:[%s3 + $0x18] sm:$0xff]
    %s125 = scalar_lea.vmem %s3, 32
    %v126 = vld [vmem:[%s125] sm:$0xff]
    %v127 = vld [vmem:[%s125 + $0x8] sm:$0xff]
    %v128 = vld [vmem:[%s125 + $0x10] sm:$0xff]
    %v129 = vld [vmem:[%s125 + $0x18] sm:$0xff]
    %s130 = scalar_lea.vmem %s3, 64
    %v131 = vld [vmem:[%s130] sm:$0xff]
    %v132 = vld [vmem:[%s130 + $0x8] sm:$0xff]
    %v133 = vld [vmem:[%s130 + $0x10] sm:$0xff]
    %v134 = vld [vmem:[%s130 + $0x18] sm:$0xff]
    %v135 = vld [vmem:[#allocation3] sm:$0xff]
    %v136 = vld [vmem:[#allocation3 + $0x8] sm:$0xff]
    %v137 = vld [vmem:[#allocation3 + $0x10] sm:$0xff]
    %v138 = vld [vmem:[#allocation3 + $0x18] sm:$0xff]
    %s139 = scalar_lea.vmem [#allocation3], 32
    %v140 = vld [vmem:[%s139] sm:$0xff]
    %v141 = vld [vmem:[%s139 + $0x8] sm:$0xff]
    %v142 = vld [vmem:[%s139 + $0x10] sm:$0xff]
    %v143 = vld [vmem:[%s139 + $0x18] sm:$0xff]
    %s144 = scalar_lea.vmem [#allocation3], 64
    %v145 = vld [vmem:[%s144] sm:$0xff]
    %v146 = vld [vmem:[%s144 + $0x8] sm:$0xff]
    %v147 = vld [vmem:[%s144 + $0x10] sm:$0xff]
    %v148 = vld [vmem:[%s144 + $0x18] sm:$0xff]
    %v149 = vld [vmem:[%s5] sm:$0x1]
    %s150 = scalar_lea.vmem %s5, 1
    %v151 = vld [vmem:[%s150] sm:$0x1]
    %s152 = scalar_lea.vmem %s5, 2
    %v153 = vld [vmem:[%s152] sm:$0x1]
    %v154 = vld [vmem:[%s6] sm:$0x1]
    %s155 = scalar_lea.vmem %s6, 1
    %v156 = vld [vmem:[%s155] sm:$0x1]
    %s157 = scalar_lea.vmem %s6, 2
    %v158 = vld [vmem:[%s157] sm:$0x1]
    %v159 = vld [vmem:[#allocation6] sm:$0xff]
    %v160 = vld [vmem:[#allocation6 + $0x8] sm:$0xff]
    %v161 = vld [vmem:[#allocation6 + $0x10] sm:$0xff]
    %v162 = vld [vmem:[#allocation6 + $0x18] sm:$0xff]
    %s163 = scalar_lea.vmem [#allocation6], 32
    %v164 = vld [vmem:[%s163] sm:$0xff]
    %v165 = vld [vmem:[%s163 + $0x8] sm:$0xff]
    %v166 = vld [vmem:[%s163 + $0x10] sm:$0xff]
    %v167 = vld [vmem:[%s163 + $0x18] sm:$0xff]
    %s168 = scalar_lea.vmem [#allocation6], 64
    %v169 = vld [vmem:[%s168] sm:$0xff]
    %v170 = vld [vmem:[%s168 + $0x8] sm:$0xff]
    %v171 = vld [vmem:[%s168 + $0x10] sm:$0xff]
    %v172 = vld [vmem:[%s168 + $0x18] sm:$0xff]
    %v173 = vld [vmem:[#allocation8] sm:$0xff]
    %v174 = vld [vmem:[#allocation8 + $0x8] sm:$0xff]
    %v175 = vld [vmem:[#allocation8 + $0x10] sm:$0xff]
    %v176 = vld [vmem:[#allocation8 + $0x18] sm:$0xff]
    %s177 = scalar_lea.vmem [#allocation8], 32
    %v178 = vld [vmem:[%s177] sm:$0xff]
    %v179 = vld [vmem:[%s177 + $0x8] sm:$0xff]
    %v180 = vld [vmem:[%s177 + $0x10] sm:$0xff]
    %v181 = vld [vmem:[%s177 + $0x18] sm:$0xff]
    %s182 = scalar_lea.vmem [#allocation8], 64
    %v183 = vld [vmem:[%s182] sm:$0xff]
    %v184 = vld [vmem:[%s182 + $0x8] sm:$0xff]
    %v185 = vld [vmem:[%s182 + $0x10] sm:$0xff]
    %v186 = vld [vmem:[%s182 + $0x18] sm:$0xff]
    %v187 = vld [vmem:[%s9] sm:$0x1]
    %s188 = scalar_lea.vmem %s9, 1
    %v189 = vld [vmem:[%s188] sm:$0x1]
    %s190 = scalar_lea.vmem %s9, 2
    %v191 = vld [vmem:[%s190] sm:$0x1]
    %v192 = vld [vmem:[%s10] sm:$0x1]
    %s193 = scalar_lea.vmem %s10, 1
    %v194 = vld [vmem:[%s193] sm:$0x1]
    %s195 = scalar_lea.vmem %s10, 2
    %v196 = vld [vmem:[%s195] sm:$0x1]
    loop: start=0, step=1, limit=8
    $region70: #{tpu_custom_call.1} parent=1 // loop_pre_header
      _
    $region71: #{tpu_custom_call.1} parent=1 // loop_header
      %s198 = sphi 0, %s202
      %p199 = scmp.ge.s32.totalorder %s198, 8
      %v203 = vphi 0.0, %v440
    $region72: #{tpu_custom_call.1} parent=1 // loop_header_branch
      %201 = sbr.rel (%p199) target = $region76
    $region73: #{tpu_custom_call.1} parent=1 // loop_body
      %s204 = smul.u32 %s198, 8
      %s205 = scalar_lea.vmem %s0, %s204
      %v206 = vld [vmem:[%s205] sm:$0xff]
      %v207 = vlaneseq
      %v208 = vand.u32 %v207, 127
      %209 = vset.pattern.permute.xlu0 0
      %210 = vperm.xlu0 %209, %v206
      %v211 = vpop.permute.xlu0 %210
      %vm212 = vcmp.eq.s32.totalorder %v208, %v211
      %v213 = vsel %vm212, 1, 0
      %v214 = vcvt.s32.f32 %v213
      %vm215 = vcmask 523264
      %v217 = vsel %vm215, %v214, 0
      %219 = vmatpush.msra.mxu0 0.0
      %220 = vmatpush.msra.mxu0 0.0
      %221 = vmatpush.msra.mxu0 0.0
      %222 = vmatpush.msra.mxu0 0.0
      %223 = vmatpush.msra.mxu0 0.0
      %224 = vmatpush.msra.mxu0 0.0
      %225 = vmatpush.msra.mxu0 0.0
      %226 = vmatpush.msra.mxu0 0.0
      %227 = vmatpush.msra.mxu0 %v120
      %228 = vmatpush.msra.mxu0 %v119
      %229 = vmatpush.msra.mxu0 %v118
      %230 = vmatpush.msra.mxu0 %v117
      %231 = vmatpush.msra.mxu0 %v116
      %232 = vmatpush.msra.mxu0 %v115
      %233 = vmatpush.msra.mxu0 %v114
      %234 = vmatpush.msra.mxu0 %v113
      %235 = vmatmul.f32.gmra.mxu0 %v217
      %v236 = vpop.f32.mrf.mxu0
      %v237 = vadd.f32 0.0, %v236
      %238 = vdwg.mxu0
      %s239 = scalar_lea.vmem [#allocation2], %s204
      %vm240 = vcmask 261120
      %241 = vst.msk [vmem:[%s239] sm:$0xff] %vm240, %v237
      %v243 = vperm.slane %v149, 0
      %v246 = vsel %vm240, %v237, 0
      %248 = vmatpush.msra.mxu0 0.0
      %249 = vmatpush.msra.mxu0 0.0
      %250 = vmatpush.msra.mxu0 0.0
      %251 = vmatpush.msra.mxu0 0.0
      %252 = vmatpush.msra.mxu0 0.0
      %253 = vmatpush.msra.mxu0 0.0
      %254 = vmatpush.msra.mxu0 0.0
      %255 = vmatpush.msra.mxu0 0.0
      %256 = vmatpush.msra.mxu0 0.0
      %257 = vmatpush.msra.mxu0 0.0
      %258 = vmatpush.msra.mxu0 0.0
      %259 = vmatpush.msra.mxu0 0.0
      %260 = vmatpush.msra.mxu0 %v124
      %261 = vmatpush.msra.mxu0 %v123
      %262 = vmatpush.msra.mxu0 %v122
      %263 = vmatpush.msra.mxu0 %v121
      %264 = vmatmul.f32.gmra.mxu0 %v246
      %v265 = vpop.f32.mrf.mxu0
      %v266 = vadd.f32 %v243, %v265
      %267 = vdwg.mxu0
      %v269 = vperm.slane %v151, 0
      %271 = vmatpush.msra.mxu0 0.0
      %272 = vmatpush.msra.mxu0 0.0
      %273 = vmatpush.msra.mxu0 0.0
      %274 = vmatpush.msra.mxu0 0.0
      %275 = vmatpush.msra.mxu0 0.0
      %276 = vmatpush.msra.mxu0 0.0
      %277 = vmatpush.msra.mxu0 0.0
      %278 = vmatpush.msra.mxu0 0.0
      %279 = vmatpush.msra.mxu0 0.0
      %280 = vmatpush.msra.mxu0 0.0
      %281 = vmatpush.msra.mxu0 0.0
      %282 = vmatpush.msra.mxu0 0.0
      %283 = vmatpush.msra.mxu0 %v129
      %284 = vmatpush.msra.mxu0 %v128
      %285 = vmatpush.msra.mxu0 %v127
      %286 = vmatpush.msra.mxu0 %v126
      %287 = vmatmul.f32.gmra.mxu0 %v246
      %v288 = vpop.f32.mrf.mxu0
      %v289 = vadd.f32 %v269, %v288
      %290 = vdwg.mxu0
      %v292 = vperm.slane %v153, 0
      %294 = vmatpush.msra.mxu0 0.0
      %295 = vmatpush.msra.mxu0 0.0
      %296 = vmatpush.msra.mxu0 0.0
      %297 = vmatpush.msra.mxu0 0.0
      %298 = vmatpush.msra.mxu0 0.0
      %299 = vmatpush.msra.mxu0 0.0
      %300 = vmatpush.msra.mxu0 0.0
      %301 = vmatpush.msra.mxu0 0.0
      %302 = vmatpush.msra.mxu0 0.0
      %303 = vmatpush.msra.mxu0 0.0
      %304 = vmatpush.msra.mxu0 0.0
      %305 = vmatpush.msra.mxu0 0.0
      %306 = vmatpush.msra.mxu0 %v134
      %307 = vmatpush.msra.mxu0 %v133
      %308 = vmatpush.msra.mxu0 %v132
      %309 = vmatpush.msra.mxu0 %v131
      %310 = vmatmul.f32.gmra.mxu0 %v246
      %v311 = vpop.f32.mrf.mxu0
      %v312 = vadd.f32 %v292, %v311
      %313 = vdwg.mxu0
      %v315 = vperm.slane %v154, 0
      %v318 = vsel %vm240, %v203, 0
      %320 = vmatpush.msra.mxu0 0.0
      %321 = vmatpush.msra.mxu0 0.0
      %322 = vmatpush.msra.mxu0 0.0
      %323 = vmatpush.msra.mxu0 0.0
      %324 = vmatpush.msra.mxu0 0.0
      %325 = vmatpush.msra.mxu0 0.0
      %326 = vmatpush.msra.mxu0 0.0
      %327 = vmatpush.msra.mxu0 0.0
      %328 = vmatpush.msra.mxu0 0.0
      %329 = vmatpush.msra.mxu0 0.0
      %330 = vmatpush.msra.mxu0 0.0
      %331 = vmatpush.msra.mxu0 0.0
      %332 = vmatpush.msra.mxu0 %v138
      %333 = vmatpush.msra.mxu0 %v137
      %334 = vmatpush.msra.mxu0 %v136
      %335 = vmatpush.msra.mxu0 %v135
      %336 = vmatmul.f32.gmra.mxu0 %v318
      %v337 = vpop.f32.mrf.mxu0
      %v338 = vadd.f32 %v315, %v337
      %339 = vdwg.mxu0
      %v341 = vperm.slane %v156, 0
      %343 = vmatpush.msra.mxu0 0.0
      %344 = vmatpush.msra.mxu0 0.0
      %345 = vmatpush.msra.mxu0 0.0
      %346 = vmatpush.msra.mxu0 0.0
      %347 = vmatpush.msra.mxu0 0.0
      %348 = vmatpush.msra.mxu0 0.0
      %349 = vmatpush.msra.mxu0 0.0
      %350 = vmatpush.msra.mxu0 0.0
      %351 = vmatpush.msra.mxu0 0.0
      %352 = vmatpush.msra.mxu0 0.0
      %353 = vmatpush.msra.mxu0 0.0
      %354 = vmatpush.msra.mxu0 0.0
      %355 = vmatpush.msra.mxu0 %v143
      %356 = vmatpush.msra.mxu0 %v142
      %357 = vmatpush.msra.mxu0 %v141
      %358 = vmatpush.msra.mxu0 %v140
      %359 = vmatmul.f32.gmra.mxu0 %v318
      %v360 = vpop.f32.mrf.mxu0
      %v361 = vadd.f32 %v341, %v360
      %362 = vdwg.mxu0
      %v364 = vperm.slane %v158, 0
      %366 = vmatpush.msra.mxu0 0.0
      %367 = vmatpush.msra.mxu0 0.0
      %368 = vmatpush.msra.mxu0 0.0
      %369 = vmatpush.msra.mxu0 0.0
      %370 = vmatpush.msra.mxu0 0.0
      %371 = vmatpush.msra.mxu0 0.0
      %372 = vmatpush.msra.mxu0 0.0
      %373 = vmatpush.msra.mxu0 0.0
      %374 = vmatpush.msra.mxu0 0.0
      %375 = vmatpush.msra.mxu0 0.0
      %376 = vmatpush.msra.mxu0 0.0
      %377 = vmatpush.msra.mxu0 0.0
      %378 = vmatpush.msra.mxu0 %v148
      %379 = vmatpush.msra.mxu0 %v147
      %380 = vmatpush.msra.mxu0 %v146
      %381 = vmatpush.msra.mxu0 %v145
      %382 = vmatmul.f32.gmra.mxu0 %v318
      %v383 = vpop.f32.mrf.mxu0
      %v384 = vadd.f32 %v364, %v383
      %385 = vdwg.mxu0
      %v386 = vadd.f32 %v266, %v338
      %v387 = vxor.u32 %v386, 2147483648
      %v388 = vmul.f32 %v387, 1.442695
      %v389 = vpow.pop %v388
      %v390 = vadd.f32 %v389, 1.0
      %v391 = vrcp.pop %v390
      %v392 = vmul.f32 %v390, %v391
      %v393 = vsub.f32 1.0, %v392
      %v394 = vmul.f32 %v391, %v393
      %v395 = vadd.f32 %v391, %v394
      %vm396 = vweird.f32 %v390
      %vm397 = vweird.f32 %v391
      %vm398 = vmor %vm396, %vm397
      %v399 = vsel %vm398, %v391, %v395
      %v400 = vand.u32 2147483647, %v390
      %vm401 = vcmp.eq.f32.partialorder %v400, 8.507059e+37
      %v402 = vand.u32 %v390, 2147483648
      %v403 = vor.u32 1.1754944e-38, %v402
      %v404 = vsel %vm401, %v403, %v399
      %v405 = vmul.f32 1.0, %v404
      %v406 = vadd.f32 %v289, %v361
      %v407 = vxor.u32 %v406, 2147483648
      %v408 = vmul.f32 %v407, 1.442695
      %v409 = vpow.pop %v408
      %v410 = vadd.f32 %v409, 1.0
      %v411 = vrcp.pop %v410
      %v412 = vmul.f32 %v410, %v411
      %v413 = vsub.f32 1.0, %v412
      %v414 = vmul.f32 %v411, %v413
      %v415 = vadd.f32 %v411, %v414
      %vm416 = vweird.f32 %v410
      %vm417 = vweird.f32 %v411
      %vm418 = vmor %vm416, %vm417
      %v419 = vsel %vm418, %v411, %v415
      %v420 = vand.u32 2147483647, %v410
      %vm421 = vcmp.eq.f32.partialorder %v420, 8.507059e+37
      %v422 = vand.u32 %v410, 2147483648
      %v423 = vor.u32 1.1754944e-38, %v422
      %v424 = vsel %vm421, %v423, %v419
      %v425 = vmul.f32 1.0, %v424
      %v426 = vmul.f32 %v405, %v384
      %v427 = vadd.f32 %v312, %v426
      %v428 = vtanh.pop %v427
      %v429 = vsub.f32 1.0, %v425
      %v430 = vmul.f32 %v429, %v428
      %v431 = vmul.f32 %v425, %v203
      %v432 = vadd.f32 %v430, %v431
      %v433 = vstv %s198
      %vm434 = vcmp.lt.s32.totalorder %v433, %v112
      %v435 = vsel %vm434, 1, 0
      %436 = vset.pattern.permute.xlu0 0
      %437 = vperm.xlu0 %436, %v435
      %v438 = vpop.permute.xlu0 %437
      %vm439 = vcmp.eq.s32.totalorder %v438, 1
      %v440 = vsel %vm439, %v432, %v203
      %v441 = vsel %vm439, %v432, 0.0
      %s442 = scalar_lea.vmem [#allocation11], %s204
      %443 = vst.msk [vmem:[%s442] sm:$0xff] %vm240, %v441
    $region74: #{tpu_custom_call.1} parent=1 // loop_footer
      %s202 = sadd.s32 1, %s198
    $region75: #{tpu_custom_call.1} parent=1 // loop_footer_branch
      %197 = sbr.rel target = $region71
    $region76: #{tpu_custom_call.1} parent=1 // loop_exit
      _
    loop: start=0, step=1, limit=8
    $region77: #{tpu_custom_call.1} parent=1 // loop_pre_header
      _
    $region78: #{tpu_custom_call.1} parent=1 // loop_header
      %s445 = sphi 0, %s449
      %p446 = scmp.ge.s32.totalorder %s445, 8
      %v450 = vphi 0.0, %v654
    $region79: #{tpu_custom_call.1} parent=1 // loop_header_branch
      %448 = sbr.rel (%p446) target = $region83
    $region80: #{tpu_custom_call.1} parent=1 // loop_body
      %s451 = ssub.s32 7, %s445
      %s452 = smul.u32 %s451, 8
      %s453 = scalar_lea.vmem [#allocation2], %s452
      %v454 = vld [vmem:[%s453] sm:$0xff]
      %v456 = vperm.slane %v187, 0
      %vm458 = vcmask 261120
      %v460 = vsel %vm458, %v454, 0
      %462 = vmatpush.msra.mxu0 0.0
      %463 = vmatpush.msra.mxu0 0.0
      %464 = vmatpush.msra.mxu0 0.0
      %465 = vmatpush.msra.mxu0 0.0
      %466 = vmatpush.msra.mxu0 0.0
      %467 = vmatpush.msra.mxu0 0.0
      %468 = vmatpush.msra.mxu0 0.0
      %469 = vmatpush.msra.mxu0 0.0
      %470 = vmatpush.msra.mxu0 0.0
      %471 = vmatpush.msra.mxu0 0.0
      %472 = vmatpush.msra.mxu0 0.0
      %473 = vmatpush.msra.mxu0 0.0
      %474 = vmatpush.msra.mxu0 %v162
      %475 = vmatpush.msra.mxu0 %v161
      %476 = vmatpush.msra.mxu0 %v160
      %477 = vmatpush.msra.mxu0 %v159
      %478 = vmatmul.f32.gmra.mxu0 %v460
      %v479 = vpop.f32.mrf.mxu0
      %v480 = vadd.f32 %v456, %v479
      %481 = vdwg.mxu0
      %v483 = vperm.slane %v189, 0
      %485 = vmatpush.msra.mxu0 0.0
      %486 = vmatpush.msra.mxu0 0.0
      %487 = vmatpush.msra.mxu0 0.0
      %488 = vmatpush.msra.mxu0 0.0
      %489 = vmatpush.msra.mxu0 0.0
      %490 = vmatpush.msra.mxu0 0.0
      %491 = vmatpush.msra.mxu0 0.0
      %492 = vmatpush.msra.mxu0 0.0
      %493 = vmatpush.msra.mxu0 0.0
      %494 = vmatpush.msra.mxu0 0.0
      %495 = vmatpush.msra.mxu0 0.0
      %496 = vmatpush.msra.mxu0 0.0
      %497 = vmatpush.msra.mxu0 %v167
      %498 = vmatpush.msra.mxu0 %v166
      %499 = vmatpush.msra.mxu0 %v165
      %500 = vmatpush.msra.mxu0 %v164
      %501 = vmatmul.f32.gmra.mxu0 %v460
      %v502 = vpop.f32.mrf.mxu0
      %v503 = vadd.f32 %v483, %v502
      %504 = vdwg.mxu0
      %v506 = vperm.slane %v191, 0
      %508 = vmatpush.msra.mxu0 0.0
      %509 = vmatpush.msra.mxu0 0.0
      %510 = vmatpush.msra.mxu0 0.0
      %511 = vmatpush.msra.mxu0 0.0
      %512 = vmatpush.msra.mxu0 0.0
      %513 = vmatpush.msra.mxu0 0.0
      %514 = vmatpush.msra.mxu0 0.0
      %515 = vmatpush.msra.mxu0 0.0
      %516 = vmatpush.msra.mxu0 0.0
      %517 = vmatpush.msra.mxu0 0.0
      %518 = vmatpush.msra.mxu0 0.0
      %519 = vmatpush.msra.mxu0 0.0
      %520 = vmatpush.msra.mxu0 %v172
      %521 = vmatpush.msra.mxu0 %v171
      %522 = vmatpush.msra.mxu0 %v170
      %523 = vmatpush.msra.mxu0 %v169
      %524 = vmatmul.f32.gmra.mxu0 %v460
      %v525 = vpop.f32.mrf.mxu0
      %v526 = vadd.f32 %v506, %v525
      %527 = vdwg.mxu0
      %v529 = vperm.slane %v192, 0
      %v532 = vsel %vm458, %v450, 0
      %534 = vmatpush.msra.mxu0 0.0
      %535 = vmatpush.msra.mxu0 0.0
      %536 = vmatpush.msra.mxu0 0.0
      %537 = vmatpush.msra.mxu0 0.0
      %538 = vmatpush.msra.mxu0 0.0
      %539 = vmatpush.msra.mxu0 0.0
      %540 = vmatpush.msra.mxu0 0.0
      %541 = vmatpush.msra.mxu0 0.0
      %542 = vmatpush.msra.mxu0 0.0
      %543 = vmatpush.msra.mxu0 0.0
      %544 = vmatpush.msra.mxu0 0.0
      %545 = vmatpush.msra.mxu0 0.0
      %546 = vmatpush.msra.mxu0 %v176
      %547 = vmatpush.msra.mxu0 %v175
      %548 = vmatpush.msra.mxu0 %v174
      %549 = vmatpush.msra.mxu0 %v173
      %550 = vmatmul.f32.gmra.mxu0 %v532
      %v551 = vpop.f32.mrf.mxu0
      %v552 = vadd.f32 %v529, %v551
      %553 = vdwg.mxu0
      %v555 = vperm.slane %v194, 0
      %557 = vmatpush.msra.mxu0 0.0
      %558 = vmatpush.msra.mxu0 0.0
      %559 = vmatpush.msra.mxu0 0.0
      %560 = vmatpush.msra.mxu0 0.0
      %561 = vmatpush.msra.mxu0 0.0
      %562 = vmatpush.msra.mxu0 0.0
      %563 = vmatpush.msra.mxu0 0.0
      %564 = vmatpush.msra.mxu0 0.0
      %565 = vmatpush.msra.mxu0 0.0
      %566 = vmatpush.msra.mxu0 0.0
      %567 = vmatpush.msra.mxu0 0.0
      %568 = vmatpush.msra.mxu0 0.0
      %569 = vmatpush.msra.mxu0 %v181
      %570 = vmatpush.msra.mxu0 %v180
      %571 = vmatpush.msra.mxu0 %v179
      %572 = vmatpush.msra.mxu0 %v178
      %573 = vmatmul.f32.gmra.mxu0 %v532
      %v574 = vpop.f32.mrf.mxu0
      %v575 = vadd.f32 %v555, %v574
      %576 = vdwg.mxu0
      %v578 = vperm.slane %v196, 0
      %580 = vmatpush.msra.mxu0 0.0
      %581 = vmatpush.msra.mxu0 0.0
      %582 = vmatpush.msra.mxu0 0.0
      %583 = vmatpush.msra.mxu0 0.0
      %584 = vmatpush.msra.mxu0 0.0
      %585 = vmatpush.msra.mxu0 0.0
      %586 = vmatpush.msra.mxu0 0.0
      %587 = vmatpush.msra.mxu0 0.0
      %588 = vmatpush.msra.mxu0 0.0
      %589 = vmatpush.msra.mxu0 0.0
      %590 = vmatpush.msra.mxu0 0.0
      %591 = vmatpush.msra.mxu0 0.0
      %592 = vmatpush.msra.mxu0 %v186
      %593 = vmatpush.msra.mxu0 %v185
      %594 = vmatpush.msra.mxu0 %v184
      %595 = vmatpush.msra.mxu0 %v183
      %596 = vmatmul.f32.gmra.mxu0 %v532
      %v597 = vpop.f32.mrf.mxu0
      %v598 = vadd.f32 %v578, %v597
      %599 = vdwg.mxu0
      %v600 = vadd.f32 %v480, %v552
      %v601 = vxor.u32 %v600, 2147483648
      %v602 = vmul.f32 %v601, 1.442695
      %v603 = vpow.pop %v602
      %v604 = vadd.f32 %v603, 1.0
      %v605 = vrcp.pop %v604
      %v606 = vmul.f32 %v604, %v605
      %v607 = vsub.f32 1.0, %v606
      %v608 = vmul.f32 %v605, %v607
      %v609 = vadd.f32 %v605, %v608
      %vm610 = vweird.f32 %v604
      %vm611 = vweird.f32 %v605
      %vm612 = vmor %vm610, %vm611
      %v613 = vsel %vm612, %v605, %v609
      %v614 = vand.u32 2147483647, %v604
      %vm615 = vcmp.eq.f32.partialorder %v614, 8.507059e+37
      %v616 = vand.u32 %v604, 2147483648
      %v617 = vor.u32 1.1754944e-38, %v616
      %v618 = vsel %vm615, %v617, %v613
      %v619 = vmul.f32 1.0, %v618
      %v620 = vadd.f32 %v503, %v575
      %v621 = vxor.u32 %v620, 2147483648
      %v622 = vmul.f32 %v621, 1.442695
      %v623 = vpow.pop %v622
      %v624 = vadd.f32 %v623, 1.0
      %v625 = vrcp.pop %v624
      %v626 = vmul.f32 %v624, %v625
      %v627 = vsub.f32 1.0, %v626
      %v628 = vmul.f32 %v625, %v627
      %v629 = vadd.f32 %v625, %v628
      %vm630 = vweird.f32 %v624
      %vm631 = vweird.f32 %v625
      %vm632 = vmor %vm630, %vm631
      %v633 = vsel %vm632, %v625, %v629
      %v634 = vand.u32 2147483647, %v624
      %vm635 = vcmp.eq.f32.partialorder %v634, 8.507059e+37
      %v636 = vand.u32 %v624, 2147483648
      %v637 = vor.u32 1.1754944e-38, %v636
      %v638 = vsel %vm635, %v637, %v633
      %v639 = vmul.f32 1.0, %v638
      %v640 = vmul.f32 %v619, %v598
      %v641 = vadd.f32 %v526, %v640
      %v642 = vtanh.pop %v641
      %v643 = vsub.f32 1.0, %v639
      %v644 = vmul.f32 %v643, %v642
      %v645 = vmul.f32 %v639, %v450
      %v646 = vadd.f32 %v644, %v645
      %v647 = vstv %s451
      %vm648 = vcmp.lt.s32.totalorder %v647, %v112
      %v649 = vsel %vm648, 1, 0
      %650 = vset.pattern.permute.xlu0 0
      %651 = vperm.xlu0 %650, %v649
      %v652 = vpop.permute.xlu0 %651
      %vm653 = vcmp.eq.s32.totalorder %v652, 1
      %v654 = vsel %vm653, %v646, 0.0
      %s655 = scalar_lea.vmem [#allocation12], %s452
      %656 = vst.msk [vmem:[%s655] sm:$0xff] %vm458, %v654
    $region81: #{tpu_custom_call.1} parent=1 // loop_footer
      %s449 = sadd.s32 1, %s445
    $region82: #{tpu_custom_call.1} parent=1 // loop_footer_branch
      %444 = sbr.rel target = $region78
    $region83: #{tpu_custom_call.1} parent=1 // loop_exit
      _
    %v657 = vld [vmem:[#allocation9] sm:$0xff]
    %v658 = vld [vmem:[#allocation9 + $0x8] sm:$0xff]
    %v659 = vld [vmem:[#allocation9 + $0x10] sm:$0xff]
    %v660 = vld [vmem:[#allocation9 + $0x18] sm:$0xff]
    %s661 = scalar_lea.vmem [#allocation9], 32
    %v662 = vld [vmem:[%s661] sm:$0xff]
    %v663 = vld [vmem:[%s661 + $0x8] sm:$0xff]
    %v664 = vld [vmem:[%s661 + $0x10] sm:$0xff]
    %v665 = vld [vmem:[%s661 + $0x18] sm:$0xff]
    %vm666 = vcmask 261120
    %v668 = vsel %vm666, %v450, 0
    %670 = vmatpush.msra.mxu0 0.0
    %671 = vmatpush.msra.mxu0 0.0
    %672 = vmatpush.msra.mxu0 0.0
    %673 = vmatpush.msra.mxu0 0.0
    %674 = vmatpush.msra.mxu0 0.0
    %675 = vmatpush.msra.mxu0 0.0
    %676 = vmatpush.msra.mxu0 0.0
    %677 = vmatpush.msra.mxu0 0.0
    %678 = vmatpush.msra.mxu0 0.0
    %679 = vmatpush.msra.mxu0 0.0
    %680 = vmatpush.msra.mxu0 0.0
    %681 = vmatpush.msra.mxu0 0.0
    %682 = vmatpush.msra.mxu0 %v665
    %683 = vmatpush.msra.mxu0 %v664
    %684 = vmatpush.msra.mxu0 %v663
    %685 = vmatpush.msra.mxu0 %v662
    %686 = vmatmul.f32.gmra.mxu0 %v668
    %v687 = vpop.f32.mrf.mxu0
    %v688 = vadd.f32 0.0, %v687
    %689 = vdwg.mxu0
    %v691 = vsel %vm666, %v203, 0
    %693 = vmatpush.msra.mxu0 0.0
    %694 = vmatpush.msra.mxu0 0.0
    %695 = vmatpush.msra.mxu0 0.0
    %696 = vmatpush.msra.mxu0 0.0
    %697 = vmatpush.msra.mxu0 0.0
    %698 = vmatpush.msra.mxu0 0.0
    %699 = vmatpush.msra.mxu0 0.0
    %700 = vmatpush.msra.mxu0 0.0
    %701 = vmatpush.msra.mxu0 0.0
    %702 = vmatpush.msra.mxu0 0.0
    %703 = vmatpush.msra.mxu0 0.0
    %704 = vmatpush.msra.mxu0 0.0
    %705 = vmatpush.msra.mxu0 %v660
    %706 = vmatpush.msra.mxu0 %v659
    %707 = vmatpush.msra.mxu0 %v658
    %708 = vmatpush.msra.mxu0 %v657
    %709 = vmatmul.f32.gmra.mxu0 %v691
    %v710 = vpop.f32.mrf.mxu0
    %v711 = vadd.f32 %v688, %v710
    %712 = vdwg.mxu0
    %v713 = vld [vmem:[%s12] sm:$0x1]
    %v715 = vperm.slane %v713, 0
    %v717 = vadd.f32 %v711, %v715
    %v718 = vtanh.pop %v717
    %719 = vst.msk [vmem:[#allocation14] sm:$0xff] %vm666, %v718
    // Predicated region
    $region84: #{tpu_custom_call.1} parent=1 // pred_check
      _
    $region85: #{tpu_custom_call.1} parent=1 // pred_check_branch
      %721 = sbr.rel (0) target = $region87
    $region86: #{tpu_custom_call.1} parent=1 // pred_region
      %723 = vsyncadd [#allocation5], 0
      %s724 = sshll.u32 [#allocation11], 4
      %s725 = int_to_ptr.vmem [resolvable:$true] %s724
      %s726 = sshll.u32 %s13, 4
      %s727 = int_to_ptr.hbm [resolvable:$true] %s726
      %732 = dma.vmem_to_hbm [thread:$0]  %s725, 1024, %s727, [#allocation5], 128, 128, 8
    $region87: #{tpu_custom_call.1} parent=1 // pred_fallthru
      _
    // Predicated region
    $region88: #{tpu_custom_call.1} parent=1 // pred_check
      _
    $region89: #{tpu_custom_call.1} parent=1 // pred_check_branch
      %734 = sbr.rel (0) target = $region91
    $region90: #{tpu_custom_call.1} parent=1 // pred_region
      %736 = vsyncadd [#allocation13], 0
      %s737 = sshll.u32 [#allocation12], 4
      %s738 = int_to_ptr.vmem [resolvable:$true] %s737
      %s739 = sshll.u32 %s14, 4
      %s740 = int_to_ptr.hbm [resolvable:$true] %s739
      %745 = dma.vmem_to_hbm [thread:$0]  %s738, 1024, %s740, [#allocation13], 128, 128, 8
    $region91: #{tpu_custom_call.1} parent=1 // pred_fallthru
      _
    // Predicated region
    $region92: #{tpu_custom_call.1} parent=1 // pred_check
      _
    $region93: #{tpu_custom_call.1} parent=1 // pred_check_branch
      %747 = sbr.rel (0) target = $region95
    $region94: #{tpu_custom_call.1} parent=1 // pred_region
      %749 = vsyncadd [#allocation13], 0
      %s751 = sshll.u32 [#allocation14], 4
      %s752 = int_to_ptr.vmem [resolvable:$true] %s751
      %s753 = sshll.u32 %s15, 4
      %s754 = int_to_ptr.hbm [resolvable:$true] %s753
      %756 = dma.vmem_to_hbm [thread:$0]  %s752, 128, %s754, [#allocation13]
    $region95: #{tpu_custom_call.1} parent=1 // pred_fallthru
      _
    // Predicated region
    $region96: #{tpu_custom_call.1} parent=1 // pred_check
      _
    $region97: #{tpu_custom_call.1} parent=1 // pred_check_branch
      %758 = sbr.rel (0) target = $region99
    $region98: #{tpu_custom_call.1} parent=1 // pred_region
      %760 = dma.done [#allocation5], 1024
    $region99: #{tpu_custom_call.1} parent=1 // pred_fallthru
      _
    // Predicated region
    $region100: #{tpu_custom_call.1} parent=1 // pred_check
      _
    $region101: #{tpu_custom_call.1} parent=1 // pred_check_branch
      %762 = sbr.rel (0) target = $region103
    $region102: #{tpu_custom_call.1} parent=1 // pred_region
      %764 = dma.done [#allocation13], 1024
    $region103: #{tpu_custom_call.1} parent=1 // pred_fallthru
      _
    // Predicated region
    $region104: #{tpu_custom_call.1} parent=1 // pred_check
      _
    $region105: #{tpu_custom_call.1} parent=1 // pred_check_branch
      %766 = sbr.rel (0) target = $region107
    $region106: #{tpu_custom_call.1} parent=1 // pred_region
      %768 = dma.done [#allocation13], 128
    $region107: #{tpu_custom_call.1} parent=1 // pred_fallthru
      _
    %769 = vsyncpa [#allocation4], 1
    %770 = vsyncpa [#allocation7], 1
    %771 = vsyncpa [#allocation10], 1
    %772 = vsyncpa [#allocation5], 1
    %773 = vsyncpa [#allocation13], 1

</llo_original>
